<compile_context>
chip_gen: v6e
topology: v6e:2x2x1
jax: 0.10.0
libtpu: 0.0.40
codegen_flags: <defaults>
</compile_context>

<pallas_src>
import jax
import jax.numpy as jnp
from jax.experimental import pallas as pl
from jax.experimental.pallas import tpu as pltpu


def mlp_kernel(x_ref, w1_ref, b1_ref, w2_ref, b2_ref, o_ref):
    """One (batch-tile, hidden-tile) grid step.

    Grid = (batch tiles ["parallel"], hidden tiles ["arbitrary" reduction]).
    The output block index is constant along the hidden axis, so o_ref (f32)
    doubles as the accumulator; b2 + sigmoid run only on the last hidden step.
    """
    h_idx = pl.program_id(1)
    last_h = pl.num_programs(1) - 1

    x = x_ref[...]
    if x.dtype != w1_ref.dtype:
        # Per-tile activation cast kept in-kernel: wrapper-side casting of x
        # would add an extra HBM round trip for the activation stream.
        x = x.astype(w1_ref.dtype)

    # Linear 1 (MXU, f32 accumulation) + bias + ReLU (VPU, f32).
    hidden = jnp.dot(x, w1_ref[...], preferred_element_type=jnp.float32)
    hidden = jnp.maximum(hidden + b1_ref[...], 0.0)

    # Partial Linear 2 for this hidden tile (MXU, f32 accumulation).
    partial = jnp.dot(hidden.astype(w2_ref.dtype), w2_ref[...],
                      preferred_element_type=jnp.float32)

    @pl.when(h_idx == 0)
    def _():
        o_ref[...] = partial

    @pl.when(h_idx > 0)
    def _():
        o_ref[...] += partial

    # Epilogue once all hidden tiles are summed: bias + sigmoid (EUP, f32).
    @pl.when(h_idx == last_h)
    def _():
        o_ref[...] = jax.nn.sigmoid(o_ref[...] + b2_ref[...])


def _round_up(x, m):
    return ((x + m - 1) // m) * m


def mlp_forward(x, w1, b1, w2, b2, *, batch_tile=1024, hidden_tile=512,
                matmul_dtype=jnp.bfloat16):
    """x: [B, D_in]; w1: [D_in, H]; b1: [1, H]; w2: [H, D_out]; b2: [1, D_out]."""
    B, D_in = x.shape
    H = w1.shape[1]
    D_out = w2.shape[1]

    # Weights feed the MXU: cast once, wrapper-side (halves weight DMA bytes
    # and resident weight VMEM).  Biases stay f32 for the VPU/EUP epilogue.
    w1 = w1.astype(matmul_dtype)
    w2 = w2.astype(matmul_dtype)
    b1 = b1.astype(jnp.float32)
    b2 = b2.astype(jnp.float32)

    # Lane-dense output: pad D_out to a 128-lane multiple (unmasked stores,
    # full-lane 2nd matmul); padding is sliced off after the call.
    D_out_p = _round_up(D_out, 128)
    if D_out_p != D_out:
        w2 = jnp.pad(w2, ((0, 0), (0, D_out_p - D_out)))
        b2 = jnp.pad(b2, ((0, 0), (0, D_out_p - D_out)))

    # Batch tile: sized for VMEM / per-step-overhead amortization, capped at
    # ceil(B/2) (rounded to a sublane multiple) so the parallel axis has >= 2
    # steps and spans both TensorCores on v7x.
    if B > 16:
        TB = min(batch_tile, _round_up(pl.cdiv(B, 2), 8))
    else:
        TB = B
    n_b = pl.cdiv(B, TB)

    # Hidden tile: keep full H resident when it fits; otherwise stream
    # 128-multiple tiles that divide H exactly (no partial reduction blocks).
    if H <= hidden_tile:
        TH = H
    else:
        TH = H  # fallback: full residency if no clean divisor exists
        for cand in range(hidden_tile, 127, -128):
            if H % cand == 0:
                TH = cand
                break
    n_h = pl.cdiv(H, TH)

    # Constant-index blocks need only one buffer; streamed blocks keep the
    # default double buffer so the next tile's DMA hides under the MXU.
    w_buf = pl.Buffered(1) if n_h == 1 else pl.Buffered(2)
    w_bufs = 1 if n_h == 1 else 2

    mm_bytes = jnp.dtype(matmul_dtype).itemsize
    x_bytes = jnp.dtype(x.dtype).itemsize
    vmem_need = (
        2 * TB * D_in * x_bytes             # x (double-buffered)
        + 2 * TB * D_out_p * 4              # out / accumulator (f32)
        + w_bufs * D_in * TH * mm_bytes     # w1
        + w_bufs * TH * 4                   # b1
        + w_bufs * TH * D_out_p * mm_bytes  # w2
        + D_out_p * 4                       # b2 (single-buffered)
    )
    # Headroom on top of residency; cap at v7x's 64 MiB physical VMEM.
    vmem_limit = int(min(max(2 * vmem_need + (4 << 20), 16 << 20), 64 << 20))

    cost = pl.CostEstimate(
        flops=2 * B * (D_in * H + H * D_out_p),
        transcendentals=B * D_out_p,  # sigmoid
        bytes_accessed=(x.size * x_bytes + w1.size * mm_bytes
                        + w2.size * mm_bytes + b1.size * 4 + b2.size * 4
                        + B * D_out_p * 4),
    )

    out = pl.pallas_call(
        mlp_kernel,
        out_shape=jax.ShapeDtypeStruct((B, D_out_p), jnp.float32),
        grid=(n_b, n_h),
        in_specs=[
            # x: tiled along batch (pipelined DMA); constant across the H axis.
            # TODO(synk): if profiling shows exposed x DMA at very large B,
            # deepen with pipeline_mode=pl.Buffered(3) on this spec only.
            pl.BlockSpec((TB, D_in), lambda i, h: (i, 0)),
            pl.BlockSpec((D_in, TH), lambda i, h: (0, h), pipeline_mode=w_buf),
            pl.BlockSpec((1, TH), lambda i, h: (0, h), pipeline_mode=w_buf),
            pl.BlockSpec((TH, D_out_p), lambda i, h: (h, 0),
                         pipeline_mode=w_buf),
            pl.BlockSpec((1, D_out_p), lambda i, h: (0, 0),
                         pipeline_mode=pl.Buffered(1)),
        ],
        out_specs=pl.BlockSpec((TB, D_out_p), lambda i, h: (i, 0)),
        compiler_params=pltpu.CompilerParams(
            dimension_semantics=("parallel", "arbitrary"),
            vmem_limit_bytes=vmem_limit,
        ),
        cost_estimate=cost,
    )(x, w1, b1, w2, b2)

    return out[:, :D_out] if D_out_p != D_out else out


def init_params(key, input_dim, hidden_dim, output_dim):
    """Deterministic init mimicking nn.Linear's U(-1/sqrt(fan_in), 1/sqrt(fan_in))."""
    k1, k2, k3, k4 = jax.random.split(key, 4)
    lim1 = 1.0 / (input_dim ** 0.5)
    lim2 = 1.0 / (hidden_dim ** 0.5)
    # Stored as [in, out] (transpose of PyTorch's [out, in]) for x @ W.
    w1 = jax.random.uniform(k1, (input_dim, hidden_dim), jnp.float32, -lim1, lim1)
    b1 = jax.random.uniform(k2, (1, hidden_dim), jnp.float32, -lim1, lim1)
    w2 = jax.random.uniform(k3, (hidden_dim, output_dim), jnp.float32, -lim2, lim2)
    b2 = jax.random.uniform(k4, (1, output_dim), jnp.float32, -lim2, lim2)
    return w1, b1, w2, b2


def mlp_reference(x, w1, b1, w2, b2):
    h = jnp.maximum(x @ w1 + b1, 0.0)
    return jax.nn.sigmoid(h @ w2 + b2)


if __name__ == "__main__":
    input_dim, hidden_dim, output_dim = 16, 32, 8
    key = jax.random.PRNGKey(0)
    kx, kp, kx2, kx3, kp3 = jax.random.split(key, 5)
    w1, b1, w2, b2 = init_params(kp, input_dim, hidden_dim, output_dim)

    # 1) Small case, strict f32 MXU path (matches the PyTorch module's toy shapes).
    batch = 8
    x = jax.random.normal(kx, (batch, input_dim), jnp.float32)
    out = jax.block_until_ready(
        mlp_forward(x, w1, b1, w2, b2, matmul_dtype=jnp.float32))
    ref = mlp_reference(x, w1, b1, w2, b2)
    assert out.shape == (batch, output_dim)
    assert jnp.allclose(out, ref, atol=1e-5, rtol=1e-5)

    # 2) Larger batch, default bf16 MXU path: exercises the 2-step batch grid
    #    (both v7x TensorCores), VMEM-resident single-buffered weights, and
    #    the lane-dense padded output.
    batch2 = 512
    x2 = jax.random.normal(kx2, (batch2, input_dim), jnp.float32)
    out2 = jax.block_until_ready(mlp_forward(x2, w1, b1, w2, b2))
    ref2 = mlp_reference(x2, w1, b1, w2, b2)
    assert out2.shape == (batch2, output_dim)
    assert jnp.allclose(out2, ref2, atol=2e-2, rtol=2e-2)

    # 3) H-streaming path: hidden_dim=256 with hidden_tile=128 -> 2 hidden
    #    tiles, accumulation in the resident output block, epilogue on the
    #    last hidden step.
    hidden_big = 256
    w1b, b1b, w2b, b2b = init_params(kp3, input_dim, hidden_big, output_dim)
    batch3 = 64
    x3 = jax.random.normal(kx3, (batch3, input_dim), jnp.float32)
    out3 = jax.block_until_ready(
        mlp_forward(x3, w1b, b1b, w2b, b2b, hidden_tile=128,
                    matmul_dtype=jnp.float32))
    ref3 = mlp_reference(x3, w1b, b1b, w2b, b2b)
    assert out3.shape == (batch3, output_dim)
    assert jnp.allclose(out3, ref3, atol=1e-4, rtol=1e-4)

    print("KERNEL_OK")
</pallas_src>

<mosaic_0001>
module attributes {stable_mosaic.version = 11 : i64} {
  func.func @mlp_kernel(%arg0: i32, %arg1: i32, %arg2: memref<8x16xf32, #tpu.memory_space<vmem>>, %arg3: memref<16x32xf32, #tpu.memory_space<vmem>>, %arg4: memref<1x32xf32, #tpu.memory_space<vmem>>, %arg5: memref<32x128xf32, #tpu.memory_space<vmem>>, %arg6: memref<1x128xf32, #tpu.memory_space<vmem>>, %arg7: memref<8x128xf32, #tpu.memory_space<vmem>>) attributes {dimension_semantics = [#tpu.dimension_semantics<parallel>, #tpu.dimension_semantics<arbitrary>], iteration_bounds = array<i64: 1, 1>, scalar_prefetch = 0 : i64, scratch_operands = 0 : i64, tpu.core_type = #tpu.core_type<tc>, window_params = [{transform_indices = @transform_0, window_bounds = array<i64: 8, 16>}, {pipeline_mode = #tpu.pipeline_mode<synchronous>, transform_indices = @transform_1, window_bounds = array<i64: 16, 32>}, {pipeline_mode = #tpu.pipeline_mode<synchronous>, transform_indices = @transform_2, window_bounds = array<i64: 1, 32>}, {pipeline_mode = #tpu.pipeline_mode<synchronous>, transform_indices = @transform_3, window_bounds = array<i64: 32, 128>}, {pipeline_mode = #tpu.pipeline_mode<synchronous>, transform_indices = @transform_4, window_bounds = array<i64: 1, 128>}, {transform_indices = @transform_5, window_bounds = array<i64: 8, 128>}]} {
    %c0 = arith.constant 0 : index
    %c0_0 = arith.constant 0 : index
    %0 = vector.load %arg2[%c0, %c0_0] : memref<8x16xf32, #tpu.memory_space<vmem>>, vector<8x16xf32>
    %c0_1 = arith.constant 0 : index
    %c0_2 = arith.constant 0 : index
    %1 = vector.load %arg3[%c0_1, %c0_2] : memref<16x32xf32, #tpu.memory_space<vmem>>, vector<16x32xf32>
    %cst = arith.constant dense<0.000000e+00> : vector<8x32xf32>
    %2 = tpu.matmul %0, %1, %cst {dimension_numbers = #tpu.dot_dimension_numbers<[1], [0], [0], [1], [0, 0, 1, 1], [], []>} : vector<8x16xf32>, vector<16x32xf32>, vector<8x32xf32> -> vector<8x32xf32>
    %c0_3 = arith.constant 0 : index
    %c0_4 = arith.constant 0 : index
    %3 = vector.load %arg4[%c0_3, %c0_4] : memref<1x32xf32, #tpu.memory_space<vmem>>, vector<1x32xf32>
    %4 = vector.broadcast %3 : vector<1x32xf32> to vector<8x32xf32>
    %5 = arith.addf %2, %4 : vector<8x32xf32>
    %cst_5 = arith.constant 0.000000e+00 : f32
    %6 = vector.broadcast %cst_5 : f32 to vector<8x32xf32>
    %7 = arith.maximumf %5, %6 : vector<8x32xf32>
    %c0_6 = arith.constant 0 : index
    %c0_7 = arith.constant 0 : index
    %8 = vector.load %arg5[%c0_6, %c0_7] : memref<32x128xf32, #tpu.memory_space<vmem>>, vector<32x128xf32>
    %cst_8 = arith.constant dense<0.000000e+00> : vector<8x128xf32>
    %9 = tpu.matmul %7, %8, %cst_8 {dimension_numbers = #tpu.dot_dimension_numbers<[1], [0], [0], [1], [0, 0, 1, 1], [], []>} : vector<8x32xf32>, vector<32x128xf32>, vector<8x128xf32> -> vector<8x128xf32>
    %c0_i32 = arith.constant 0 : i32
    %10 = arith.cmpi eq, %arg1, %c0_i32 : i32
    %11 = arith.extui %10 : i1 to i32
    %c0_i32_9 = arith.constant 0 : i32
    %12 = arith.cmpi ne, %11, %c0_i32_9 : i32
    scf.if %12 {
      %c0_14 = arith.constant 0 : index
      %c0_15 = arith.constant 0 : index
      %19 = vector.load %arg7[%c0_14, %c0_15] : memref<8x128xf32, #tpu.memory_space<vmem>>, vector<8x128xf32>
      tpu.vector_store %arg7[%c0_14, %c0_15], %9 {strides = array<i32>} : memref<8x128xf32, #tpu.memory_space<vmem>>, vector<8x128xf32>,
    } else {
    }
    %c0_i32_10 = arith.constant 0 : i32
    %13 = arith.cmpi sgt, %arg1, %c0_i32_10 : i32
    %14 = arith.extui %13 : i1 to i32
    %c0_i32_11 = arith.constant 0 : i32
    %15 = arith.cmpi ne, %14, %c0_i32_11 : i32
    scf.if %15 {
      %c0_14 = arith.constant 0 : index
      %c0_15 = arith.constant 0 : index
      %19 = vector.load %arg7[%c0_14, %c0_15] : memref<8x128xf32, #tpu.memory_space<vmem>>, vector<8x128xf32>
      %20 = arith.addf %19, %9 : vector<8x128xf32>
      %c0_16 = arith.constant 0 : index
      %c0_17 = arith.constant 0 : index
      %21 = vector.load %arg7[%c0_16, %c0_17] : memref<8x128xf32, #tpu.memory_space<vmem>>, vector<8x128xf32>
      tpu.vector_store %arg7[%c0_16, %c0_17], %20 {strides = array<i32>} : memref<8x128xf32, #tpu.memory_space<vmem>>, vector<8x128xf32>,
    } else {
    }
    %c0_i32_12 = arith.constant 0 : i32
    %16 = arith.cmpi eq, %arg1, %c0_i32_12 : i32
    %17 = arith.extui %16 : i1 to i32
    %c0_i32_13 = arith.constant 0 : i32
    %18 = arith.cmpi ne, %17, %c0_i32_13 : i32
    scf.if %18 {
      %c0_14 = arith.constant 0 : index
      %c0_15 = arith.constant 0 : index
      %19 = vector.load %arg7[%c0_14, %c0_15] : memref<8x128xf32, #tpu.memory_space<vmem>>, vector<8x128xf32>
      %c0_16 = arith.constant 0 : index
      %c0_17 = arith.constant 0 : index
      %20 = vector.load %arg6[%c0_16, %c0_17] : memref<1x128xf32, #tpu.memory_space<vmem>>, vector<1x128xf32>
      %21 = vector.broadcast %20 : vector<1x128xf32> to vector<8x128xf32>
      %22 = arith.addf %19, %21 : vector<8x128xf32>
      %23 = arith.negf %22 : vector<8x128xf32>
      %24 = math.exp %23 : vector<8x128xf32>
      %cst_18 = arith.constant 1.000000e+00 : f32
      %25 = vector.broadcast %cst_18 : f32 to vector<8x128xf32>
      %26 = arith.addf %25, %24 : vector<8x128xf32>
      %27 = arith.divf %25, %26 : vector<8x128xf32>
      %c0_19 = arith.constant 0 : index
      %c0_20 = arith.constant 0 : index
      %28 = vector.load %arg7[%c0_19, %c0_20] : memref<8x128xf32, #tpu.memory_space<vmem>>, vector<8x128xf32>
      tpu.vector_store %arg7[%c0_19, %c0_20], %27 {strides = array<i32>} : memref<8x128xf32, #tpu.memory_space<vmem>>, vector<8x128xf32>,
    } else {
    }
    return
  }
  func.func @transform_0(%arg0: i32, %arg1: i32) -> (i32, i32) {
    %c0_i32 = arith.constant 0 : i32
    %c0_i32_0 = arith.constant 0 : i32
    return %arg0, %c0_i32 : i32, i32
  }
  func.func @transform_1(%arg0: i32, %arg1: i32) -> (i32, i32) {
    %c0_i32 = arith.constant 0 : i32
    %c0_i32_0 = arith.constant 0 : i32
    return %c0_i32, %arg1 : i32, i32
  }
  func.func @transform_2(%arg0: i32, %arg1: i32) -> (i32, i32) {
    %c0_i32 = arith.constant 0 : i32
    %c0_i32_0 = arith.constant 0 : i32
    return %c0_i32, %arg1 : i32, i32
  }
  func.func @transform_3(%arg0: i32, %arg1: i32) -> (i32, i32) {
    %c0_i32 = arith.constant 0 : i32
    %c0_i32_0 = arith.constant 0 : i32
    return %arg1, %c0_i32 : i32, i32
  }
  func.func @transform_4(%arg0: i32, %arg1: i32) -> (i32, i32) {
    %c0_i32 = arith.constant 0 : i32
    %c0_i32_0 = arith.constant 0 : i32
    %c0_i32_1 = arith.constant 0 : i32
    return %c0_i32, %c0_i32_0 : i32, i32
  }
  func.func @transform_5(%arg0: i32, %arg1: i32) -> (i32, i32) {
    %c0_i32 = arith.constant 0 : i32
    %c0_i32_0 = arith.constant 0 : i32
    return %arg0, %c0_i32 : i32, i32
  }
}

</mosaic_0001>

<llo_original>
// kernel: tpu_custom_call.1
$region0: #{tpu_custom_call.1}
  #allocation0 [shape = 'u32[]', space=smem, size = 0x4, offset = 0x4, fixed_abs, tag = 'smem constant byte address 0x4 - core index']
  #allocation1 [shape = 'u32[144,128]{1,0:T(1,128)}', space=vmem, size = 0x12000, scoped, tag = 'internal scratch']
  %s0 = inlined_call_operand.hbm [shape: f32[8,16], index: 0, kind: input, shape index: {}]
  %s1 = inlined_call_operand.hbm [shape: f32[16,32], index: 1, kind: input, shape index: {}]
  %s2 = inlined_call_operand.vmem [shape: f32[1,32], index: 2, kind: input, shape index: {}]
  %s3 = inlined_call_operand.hbm [shape: f32[32,128], index: 3, kind: input, shape index: {}]
  %s4 = inlined_call_operand.vmem [shape: f32[1,128], index: 4, kind: input, shape index: {}]
  %s5 = inlined_call_operand.hbm [shape: f32[8,128], index: 5, kind: output, shape index: {}]
  %s6 = sld [smem:[#allocation0]]
  $region54: #{tpu_custom_call.1} parent=0
    _
  %s8 = ssub.s32 1, %s6
  %s9 = scalar_select 0, %s8, %s6
  $region1: #{tpu_custom_call.1} parent=0
    #allocation2 [shape = 'u8[4096]{0}', space=vmem, size = 0x1000, scoped, tag = 'input window, operand 0, single buffered']
    #allocation3 [shape = 's32[1]{0}', space=sflag, size = 0x4, scoped, tag = 'scoped memory for tpu_custom_call.1']
    #allocation4 [shape = 's32[1]{0}', space=sflag, size = 0x4, scoped, tag = 'scoped memory for tpu_custom_call.1']
    #allocation5 [shape = 'u8[8192]{0}', space=vmem, size = 0x2000, scoped, tag = 'input window, operand 1, single buffered']
    #allocation6 [shape = 's32[1]{0}', space=sflag, size = 0x4, scoped, tag = 'scoped memory for tpu_custom_call.1']
    #allocation7 [shape = 'u8[16384]{0}', space=vmem, size = 0x4000, scoped, tag = 'input window, operand 3, single buffered']
    #allocation8 [shape = 'u8[4096]{0}', space=vmem, size = 0x1000, scoped, tag = 'output window, operand 0, single buffered']
    %10 = vsyncpa [#allocation3], 0
    %11 = vsyncpa [#allocation6], 0
    %12 = vsyncpa [#allocation4], 0
    // Predicated region
    $region2: #{tpu_custom_call.1} parent=1 // pred_check
      _
    $region3: #{tpu_custom_call.1} parent=1 // pred_check_branch
      %14 = sbr.rel (0) target = $region5
    $region4: #{tpu_custom_call.1} parent=1 // pred_region
      %s16 = ssub.s32 128, 128
      %17 = vsyncadd [#allocation3], %s16
      %s19 = sshll.u32 [#allocation2], 4
      %s20 = int_to_ptr.vmem [resolvable:$true] %s19
      %22 = dma.hbm_to_vmem [thread:$0]  %s0, 128, %s20, [#allocation3]
    $region5: #{tpu_custom_call.1} parent=1 // pred_fallthru
      _
    // Predicated region
    $region6: #{tpu_custom_call.1} parent=1 // pred_check
      _
    $region7: #{tpu_custom_call.1} parent=1 // pred_check_branch
      %24 = sbr.rel (0) target = $region9
    $region8: #{tpu_custom_call.1} parent=1 // pred_region
      %s26 = ssub.s32 256, 256
      %27 = vsyncadd [#allocation6], %s26
      %s28 = sshll.u32 [#allocation5], 4
      %s29 = int_to_ptr.vmem [resolvable:$true] %s28
      %34 = dma.hbm_to_vmem [thread:$0]  %s1, 256, %s29, [#allocation6], 128, 128, 8
    $region9: #{tpu_custom_call.1} parent=1 // pred_fallthru
      _
    // Predicated region
    $region10: #{tpu_custom_call.1} parent=1 // pred_check
      _
    $region11: #{tpu_custom_call.1} parent=1 // pred_check_branch
      %36 = sbr.rel (0) target = $region13
    $region12: #{tpu_custom_call.1} parent=1 // pred_region
      _
    $region13: #{tpu_custom_call.1} parent=1 // pred_fallthru
      _
    // Predicated region
    $region14: #{tpu_custom_call.1} parent=1 // pred_check
      _
    $region15: #{tpu_custom_call.1} parent=1 // pred_check_branch
      %38 = sbr.rel (0) target = $region17
    $region16: #{tpu_custom_call.1} parent=1 // pred_region
      %s40 = ssub.s32 512, 512
      %41 = vsyncadd [#allocation6], %s40
      %s42 = sshll.u32 [#allocation7], 4
      %s43 = int_to_ptr.vmem [resolvable:$true] %s42
      %48 = dma.hbm_to_vmem [thread:$0]  %s3, 512, %s43, [#allocation6], 128, 128, 8
    $region17: #{tpu_custom_call.1} parent=1 // pred_fallthru
      _
    // Predicated region
    $region18: #{tpu_custom_call.1} parent=1 // pred_check
      _
    $region19: #{tpu_custom_call.1} parent=1 // pred_check_branch
      %50 = sbr.rel (0) target = $region21
    $region20: #{tpu_custom_call.1} parent=1 // pred_region
      _
    $region21: #{tpu_custom_call.1} parent=1 // pred_fallthru
      _
    // Predicated region
    $region22: #{tpu_custom_call.1} parent=1 // pred_check
      _
    $region23: #{tpu_custom_call.1} parent=1 // pred_check_branch
      %52 = sbr.rel (0) target = $region25
    $region24: #{tpu_custom_call.1} parent=1 // pred_region
      %53 = dma.done [#allocation3], 128
    $region25: #{tpu_custom_call.1} parent=1 // pred_fallthru
      _
    // Predicated region
    $region26: #{tpu_custom_call.1} parent=1 // pred_check
      _
    $region27: #{tpu_custom_call.1} parent=1 // pred_check_branch
      %55 = sbr.rel (0) target = $region29
    $region28: #{tpu_custom_call.1} parent=1 // pred_region
      %56 = dma.done [#allocation6], 256
    $region29: #{tpu_custom_call.1} parent=1 // pred_fallthru
      _
    // Predicated region
    $region30: #{tpu_custom_call.1} parent=1 // pred_check
      _
    $region31: #{tpu_custom_call.1} parent=1 // pred_check_branch
      %58 = sbr.rel (0) target = $region33
    $region32: #{tpu_custom_call.1} parent=1 // pred_region
      %59 = dma.done [#allocation6], 512
    $region33: #{tpu_custom_call.1} parent=1 // pred_fallthru
      _
    %v60 = vld [vmem:[#allocation2] sm:$0xff]
    %v61 = vld [vmem:[#allocation5] sm:$0xff]
    %v62 = vld [vmem:[#allocation5 + $0x8] sm:$0xff]
    %v63 = vld [vmem:[%s2] sm:$0x1]
    %v65 = vlaneseq
    %v66 = vshrl.u32 %v65, 7
    %v67 = vsub.s32 0, %v66
    %v68 = vrot.slane %v63, %v67
    %vm70 = vcmask 130048
    %v72 = vsel %vm70, %v60, 0
    %74 = vmatprep.subr.mxu0 0.0
    %75 = vmatpush1.msra.mxu0 0.0
    %76 = vmatprep.subr.mxu0 0.0
    %77 = vmatpush1.msra.mxu0 0.0
    %78 = vmatprep.subr.mxu0 0.0
    %79 = vmatpush1.msra.mxu0 0.0
    %80 = vmatprep.subr.mxu0 0.0
    %81 = vmatpush1.msra.mxu0 0.0
    %82 = vmatprep.subr.mxu0 0.0
    %83 = vmatpush1.msra.mxu0 0.0
    %84 = vmatprep.subr.mxu0 0.0
    %85 = vmatpush1.msra.mxu0 0.0
    %86 = vmatprep.subr.mxu0 0.0
    %87 = vmatpush1.msra.mxu0 0.0
    %88 = vmatprep.subr.mxu0 0.0
    %89 = vmatpush1.msra.mxu0 0.0
    %90 = vmatprep.subr.mxu0 0.0
    %91 = vmatpush1.msra.mxu0 0.0
    %92 = vmatprep.subr.mxu0 0.0
    %93 = vmatpush1.msra.mxu0 0.0
    %94 = vmatprep.subr.mxu0 0.0
    %95 = vmatpush1.msra.mxu0 0.0
    %96 = vmatprep.subr.mxu0 0.0
    %97 = vmatpush1.msra.mxu0 0.0
    %98 = vmatprep.subr.mxu0 0.0
    %99 = vmatpush1.msra.mxu0 0.0
    %100 = vmatprep.subr.mxu0 0.0
    %101 = vmatpush1.msra.mxu0 0.0
    %102 = vmatprep.subr.mxu0 0.0
    %103 = vmatpush1.msra.mxu0 %v62
    %104 = vmatprep.subr.mxu0 0.0
    %105 = vmatpush1.msra.mxu0 %v61
    %106 = vmatprep.subr.mxu0 0.0
    %107 = vmatpush2.msra.mxu0 0.0
    %108 = vmatprep.subr.mxu0 0.0
    %109 = vmatpush2.msra.mxu0 0.0
    %110 = vmatprep.subr.mxu0 0.0
    %111 = vmatpush2.msra.mxu0 0.0
    %112 = vmatprep.subr.mxu0 0.0
    %113 = vmatpush2.msra.mxu0 0.0
    %114 = vmatprep.subr.mxu0 0.0
    %115 = vmatpush2.msra.mxu0 0.0
    %116 = vmatprep.subr.mxu0 0.0
    %117 = vmatpush2.msra.mxu0 0.0
    %118 = vmatprep.subr.mxu0 0.0
    %119 = vmatpush2.msra.mxu0 0.0
    %120 = vmatprep.subr.mxu0 0.0
    %121 = vmatpush2.msra.mxu0 0.0
    %122 = vmatprep.subr.mxu0 0.0
    %123 = vmatpush2.msra.mxu0 0.0
    %124 = vmatprep.subr.mxu0 0.0
    %125 = vmatpush2.msra.mxu0 0.0
    %126 = vmatprep.subr.mxu0 0.0
    %127 = vmatpush2.msra.mxu0 0.0
    %128 = vmatprep.subr.mxu0 0.0
    %129 = vmatpush2.msra.mxu0 0.0
    %130 = vmatprep.subr.mxu0 0.0
    %131 = vmatpush2.msra.mxu0 0.0
    %132 = vmatprep.subr.mxu0 0.0
    %133 = vmatpush2.msra.mxu0 0.0
    %134 = vmatprep.subr.mxu0 0.0
    %135 = vmatpush2.msra.mxu0 0.0
    %136 = vmatprep.subr.mxu0 0.0
    %137 = vmatpush2.msra.mxu0 0.0
    %138 = vmatprep.mubr.f32.mxu0 0.0
    %139 = vmatmul.mubr.f32.gmra.mxu0 %v72
    %v140 = vpop.f32.mrf.mxu0
    %v141 = vadd.f32 %v68, %v140
    %v142 = vpop.f32.mrf.mxu0
    %143 = vdwg.mxu0
    %v144 = vmax.f32 %v141, 0.0
    %v145 = vld [vmem:[#allocation7] sm:$0xff]
    %v146 = vld [vmem:[#allocation7 + $0x8] sm:$0xff]
    %v147 = vld [vmem:[#allocation7 + $0x10] sm:$0xff]
    %v148 = vld [vmem:[#allocation7 + $0x18] sm:$0xff]
    %vm149 = vcmask 261120
    %v151 = vsel %vm149, %v144, 0
    %153 = vmatprep.subr.mxu0 0.0
    %154 = vmatpush1.msra.mxu0 0.0
    %155 = vmatprep.subr.mxu0 0.0
    %156 = vmatpush1.msra.mxu0 0.0
    %157 = vmatprep.subr.mxu0 0.0
    %158 = vmatpush1.msra.mxu0 0.0
    %159 = vmatprep.subr.mxu0 0.0
    %160 = vmatpush1.msra.mxu0 0.0
    %161 = vmatprep.subr.mxu0 0.0
    %162 = vmatpush1.msra.mxu0 0.0
    %163 = vmatprep.subr.mxu0 0.0
    %164 = vmatpush1.msra.mxu0 0.0
    %165 = vmatprep.subr.mxu0 0.0
    %166 = vmatpush1.msra.mxu0 0.0
    %167 = vmatprep.subr.mxu0 0.0
    %168 = vmatpush1.msra.mxu0 0.0
    %169 = vmatprep.subr.mxu0 0.0
    %170 = vmatpush1.msra.mxu0 0.0
    %171 = vmatprep.subr.mxu0 0.0
    %172 = vmatpush1.msra.mxu0 0.0
    %173 = vmatprep.subr.mxu0 0.0
    %174 = vmatpush1.msra.mxu0 0.0
    %175 = vmatprep.subr.mxu0 0.0
    %176 = vmatpush1.msra.mxu0 0.0
    %177 = vmatprep.subr.mxu0 0.0
    %178 = vmatpush1.msra.mxu0 %v148
    %179 = vmatprep.subr.mxu0 0.0
    %180 = vmatpush1.msra.mxu0 %v147
    %181 = vmatprep.subr.mxu0 0.0
    %182 = vmatpush1.msra.mxu0 %v146
    %183 = vmatprep.subr.mxu0 0.0
    %184 = vmatpush1.msra.mxu0 %v145
    %185 = vmatprep.subr.mxu0 0.0
    %186 = vmatpush2.msra.mxu0 0.0
    %187 = vmatprep.subr.mxu0 0.0
    %188 = vmatpush2.msra.mxu0 0.0
    %189 = vmatprep.subr.mxu0 0.0
    %190 = vmatpush2.msra.mxu0 0.0
    %191 = vmatprep.subr.mxu0 0.0
    %192 = vmatpush2.msra.mxu0 0.0
    %193 = vmatprep.subr.mxu0 0.0
    %194 = vmatpush2.msra.mxu0 0.0
    %195 = vmatprep.subr.mxu0 0.0
    %196 = vmatpush2.msra.mxu0 0.0
    %197 = vmatprep.subr.mxu0 0.0
    %198 = vmatpush2.msra.mxu0 0.0
    %199 = vmatprep.subr.mxu0 0.0
    %200 = vmatpush2.msra.mxu0 0.0
    %201 = vmatprep.subr.mxu0 0.0
    %202 = vmatpush2.msra.mxu0 0.0
    %203 = vmatprep.subr.mxu0 0.0
    %204 = vmatpush2.msra.mxu0 0.0
    %205 = vmatprep.subr.mxu0 0.0
    %206 = vmatpush2.msra.mxu0 0.0
    %207 = vmatprep.subr.mxu0 0.0
    %208 = vmatpush2.msra.mxu0 0.0
    %209 = vmatprep.subr.mxu0 0.0
    %210 = vmatpush2.msra.mxu0 0.0
    %211 = vmatprep.subr.mxu0 0.0
    %212 = vmatpush2.msra.mxu0 0.0
    %213 = vmatprep.subr.mxu0 0.0
    %214 = vmatpush2.msra.mxu0 0.0
    %215 = vmatprep.subr.mxu0 0.0
    %216 = vmatpush2.msra.mxu0 0.0
    %217 = vmatprep.mubr.f32.mxu0 0.0
    %218 = vmatmul.mubr.f32.gmra.mxu0 %v151
    %v219 = vpop.f32.mrf.mxu0
    %v220 = vadd.f32 0.0, %v219
    %v221 = vpop.f32.mrf.mxu0
    %222 = vdwg.mxu0
    %p223 = scmp.eq.s32.totalorder 0, 0
    // Predicated region
    $region34: #{tpu_custom_call.1} parent=1 // pred_check
      %p224 = pneg %p223
    $region35: #{tpu_custom_call.1} parent=1 // pred_check_branch
      %226 = sbr.rel (%p224) target = $region37
    $region36: #{tpu_custom_call.1} parent=1 // pred_region
      %227 = vst [vmem:[#allocation8] sm:$0xff] %v220
    $region37: #{tpu_custom_call.1} parent=1 // pred_fallthru
      _
    %p228 = scmp.gt.s32.totalorder 0, 0
    // Predicated region
    $region38: #{tpu_custom_call.1} parent=1 // pred_check
      %p229 = pneg %p228
    $region39: #{tpu_custom_call.1} parent=1 // pred_check_branch
      %231 = sbr.rel (%p229) target = $region41
    $region40: #{tpu_custom_call.1} parent=1 // pred_region
      %v232 = vld [vmem:[#allocation8] sm:$0xff]
      %v233 = vadd.f32 %v232, %v220
      %234 = vst [vmem:[#allocation8] sm:$0xff] %v233
    $region41: #{tpu_custom_call.1} parent=1 // pred_fallthru
      _
    // Predicated region
    $region42: #{tpu_custom_call.1} parent=1 // pred_check
      %p235 = pneg %p223
    $region43: #{tpu_custom_call.1} parent=1 // pred_check_branch
      %237 = sbr.rel (%p235) target = $region45
    $region44: #{tpu_custom_call.1} parent=1 // pred_region
      %v238 = vld [vmem:[#allocation8] sm:$0xff]
      %v239 = vld [vmem:[%s4] sm:$0x1]
      %v241 = vlaneseq
      %v242 = vshrl.u32 %v241, 7
      %v243 = vsub.s32 0, %v242
      %v244 = vrot.slane %v239, %v243
      %v246 = vadd.f32 %v238, %v244
      %v247 = vxor.u32 %v246, 2147483648
      %v248 = vmul.f32 %v247, 1.442695
      %v249 = vpow.pop %v248
      %v250 = vadd.f32 %v249, 1.0
      %v251 = vrcp.pop %v250
      %v252 = vmul.f32 1.0, %v251
      %253 = vst [vmem:[#allocation8] sm:$0xff] %v252
    $region45: #{tpu_custom_call.1} parent=1 // pred_fallthru
      _
    // Predicated region
    $region46: #{tpu_custom_call.1} parent=1 // pred_check
      _
    $region47: #{tpu_custom_call.1} parent=1 // pred_check_branch
      %255 = sbr.rel (0) target = $region49
    $region48: #{tpu_custom_call.1} parent=1 // pred_region
      %s257 = ssub.s32 128, 128
      %258 = vsyncadd [#allocation4], %s257
      %s260 = sshll.u32 [#allocation8], 4
      %s261 = int_to_ptr.vmem [resolvable:$true] %s260
      %263 = dma.vmem_to_hbm [thread:$0]  %s261, 128, %s5, [#allocation4]
    $region49: #{tpu_custom_call.1} parent=1 // pred_fallthru
      _
    // Predicated region
    $region50: #{tpu_custom_call.1} parent=1 // pred_check
      _
    $region51: #{tpu_custom_call.1} parent=1 // pred_check_branch
      %265 = sbr.rel (0) target = $region53
    $region52: #{tpu_custom_call.1} parent=1 // pred_region
      %266 = dma.done [#allocation4], 128
    $region53: #{tpu_custom_call.1} parent=1 // pred_fallthru
      _
    %267 = vsyncpa [#allocation3], 1
    %268 = vsyncpa [#allocation6], 1
    %269 = vsyncpa [#allocation4], 1

</llo_original>
